<compile_context>
chip_gen: v7x
topology: tpu7x:2x2x1
jax: 0.10.0
libtpu: 0.0.40
codegen_flags: <defaults>
</compile_context>

<pallas_src>
import functools

import jax
import jax.numpy as jnp
from jax import lax
from jax.experimental import pallas as pl
from jax.experimental.pallas import tpu as pltpu

_LANE = 128
_MAX_COLS = 16384                     # cap on the full-extent lane dim
_TARGET_BLOCK_BYTES = 4 << 20         # ~4 MiB per block buffer


def _gaussian_noise_kernel(seed_ref, x_ref, o_ref, *, mean, std):
    rows, lanes = x_ref.shape
    block_elems = rows * lanes

    # ---- absolute flat element index, uint32 (wraps; independent of tiling) --
    base = pl.program_id(0).astype(jnp.uint32) * jnp.uint32(block_elems)
    idx = (lax.broadcasted_iota(jnp.int32, (rows, lanes), 0) * lanes
           + lax.broadcasted_iota(jnp.int32, (rows, lanes), 1)).astype(jnp.uint32)
    idx = idx + base

    # ---- stateless counter PRNG: lowbias32-style hash of (index ^ mixed seed) -
    key = (seed_ref[0].astype(jnp.uint32) ^ jnp.uint32(0x9E3779B9)) * jnp.uint32(0x85EBCA6B)
    v = idx ^ key
    v = v ^ (v >> 16)
    v = v * jnp.uint32(0x7FEB352D)
    v = v ^ (v >> 15)
    v = v * jnp.uint32(0x846CA68B)
    v = v ^ (v >> 16)

    # ---- uint32 -> uniform (0,1): OR 23 mantissa bits into exponent of 1.0 ----
    # Low mantissa bit forced so u in [2^-23, 1 - 2^-23]; log(p) stays finite.
    fbits = (v >> 9) | jnp.uint32(1) | jnp.uint32(0x3F800000)
    u = pltpu.bitcast(fbits, jnp.float32) - jnp.float32(1.0)

    # ---- uniform -> standard normal (Abramowitz & Stegun 26.2.23) ------------
    p = jnp.minimum(u, 1.0 - u)
    t = jnp.sqrt(jnp.float32(-2.0) * jnp.log(p))
    num = (0.010328 * t + 0.802853) * t + 2.515517
    den = ((0.001308 * t + 0.189269) * t + 1.432788) * t + 1.0
    z_mag = t - num * pl.reciprocal(den, approx=True)   # EUP, not a VALU divide
    z = jnp.where(u < 0.5, -z_mag, z_mag)

    # ---- x + x*(z*std + mean) == x * ((1 + mean) + std * z) ------------------
    xv = x_ref[...].astype(jnp.float32)
    o_ref[...] = (xv * (jnp.float32(1.0 + mean) + jnp.float32(std) * z)).astype(o_ref.dtype)


def _choose_2d(shape, n):
    """Pick a copy-free (rows, cols) factorization of the flat tensor."""
    if n % _LANE == 0:
        return n // _LANE, _LANE                     # lane-dense, unmasked stores
    # n not 128-divisible: use the largest trailing-dim product <= _MAX_COLS as
    # the (full-extent) lane dim; Pallas masks the ragged lanes and we avoid the
    # pad + slice HBM round trips entirely.
    cols, best = 1, None
    for d in reversed(shape):
        cols *= int(d)
        if cols <= _MAX_COLS:
            best = cols
        else:
            break
    if best is None:
        return None                                  # rare: fall back to padding
    return n // best, best


def gaussian_noise_decoder(x, y, *, seed=0, mean=0.0, std=1.0, block_rows=8192):
    """x: any-shape float array (e.g. NCHW); y: passed through unchanged."""
    orig_shape = x.shape
    orig_dtype = x.dtype
    n = int(x.size)
    if n == 0:
        return x, y

    itemsize = jnp.dtype(orig_dtype).itemsize
    factor = _choose_2d(orig_shape, n)
    pad = 0
    if factor is None:
        # TODO(synk): pad/slice fallback only for huge non-128-divisible 1-D shapes.
        pad = (-n) % _LANE
        flat = jnp.pad(x.reshape(-1), (0, pad))
        rows, cols = flat.shape[0] // _LANE, _LANE
        x2d = flat.reshape(rows, cols)
    else:
        rows, cols = factor
        x2d = x.reshape(rows, cols)

    # --- block-row choice: big blocks, but always >=2 grid steps when possible -
    sub = max(8, 32 // itemsize)                     # sublane multiple for dtype
    max_tr = max(sub, ((_TARGET_BLOCK_BYTES // (cols * itemsize)) // sub) * sub)
    if rows <= 2 * sub:
        tr = rows                                    # tiny input: one full-extent block
    else:
        half = -(-rows // 2)                         # cdiv(rows, 2)
        half = ((half + sub - 1) // sub) * sub
        tr = max(sub, min(block_rows, max_tr, half))
    grid = (-(-rows // tr),)

    # Explicit VMEM limit so the large double-buffered blocks also fit on v5e's
    # 16 MiB default scoped limit (cap at 64 MiB = v7x physical VMEM per TC).
    block_bytes = tr * cols * itemsize
    vmem_limit = int(min(64 << 20, max(32 << 20, 4 * block_bytes + (4 << 20))))

    seed_arr = jnp.asarray([seed], dtype=jnp.int32)

    total = rows * cols
    cost = pl.CostEstimate(
        flops=32 * total,
        transcendentals=3 * total,                   # log, sqrt, reciprocal / elem
        bytes_accessed=2 * total * itemsize,
    )

    out2d = pl.pallas_call(
        functools.partial(_gaussian_noise_kernel, mean=float(mean), std=float(std)),
        out_shape=jax.ShapeDtypeStruct((rows, cols), orig_dtype),
        grid_spec=pltpu.PrefetchScalarGridSpec(
            num_scalar_prefetch=1,
            grid=grid,
            in_specs=[pl.BlockSpec((tr, cols), lambda i, seed_ref: (i, 0))],
            out_specs=pl.BlockSpec((tr, cols), lambda i, seed_ref: (i, 0)),
        ),
        compiler_params=pltpu.CompilerParams(
            dimension_semantics=("parallel",),       # stateless per-element noise
            vmem_limit_bytes=vmem_limit,
        ),
        cost_estimate=cost,
    )(seed_arr, x2d)

    if pad:
        x_transform = out2d.reshape(-1)[:n].reshape(orig_shape)
    else:
        x_transform = out2d.reshape(orig_shape)
    return x_transform, y


if __name__ == "__main__":
    key = jax.random.PRNGKey(0)
    kx, ky, kx2 = jax.random.split(key, 3)

    # Small NCHW input consistent with a conv-style decoder input.
    x = jax.random.normal(kx, (2, 4, 16, 16), dtype=jnp.float32)
    y = jax.random.randint(ky, (2,), 0, 10, dtype=jnp.int32)

    x_t, y_out = gaussian_noise_decoder(x, y, seed=0, mean=0.0, std=1.0)
    jax.block_until_ready(x_t)
    jax.block_until_ready(y_out)

    # Shapes/dtypes preserved, y untouched, output finite.
    assert x_t.shape == x.shape and x_t.dtype == x.dtype
    assert bool(jnp.all(y_out == y))
    assert bool(jnp.all(jnp.isfinite(x_t)))

    # Recover the multiplicative noise z = x_t / x - 1 (mean=0, std=1 here) and
    # loosely check it looks standard normal.
    z = (x_t / x - 1.0).reshape(-1)
    z_mean = float(jnp.mean(z))
    z_std = float(jnp.std(z))
    assert abs(z_mean) < 0.25, z_mean
    assert 0.7 < z_std < 1.3, z_std

    # Exercise the no-pad ragged path (n % 128 != 0 -> full-extent lane dim).
    x2 = jax.random.normal(kx2, (2, 3, 5, 7), dtype=jnp.float32)
    x2_t, y2_out = gaussian_noise_decoder(x2, y, seed=3, mean=0.0, std=1.0)
    jax.block_until_ready(x2_t)
    assert x2_t.shape == x2.shape and x2_t.dtype == x2.dtype
    assert bool(jnp.all(jnp.isfinite(x2_t)))
    assert bool(jnp.all(y2_out == y))

    print("KERNEL_OK")
</pallas_src>

<mosaic_0001>
module attributes {stable_mosaic.version = 11 : i64} {
  func.func @_gaussian_noise_kernel(%arg0: i32, %arg1: memref<1xi32, #tpu.memory_space<smem>>, %arg2: memref<16x128xf32, #tpu.memory_space<vmem>>, %arg3: memref<16x128xf32, #tpu.memory_space<vmem>>) attributes {dimension_semantics = [#tpu.dimension_semantics<parallel>], iteration_bounds = array<i64: 1>, scalar_prefetch = 1 : i64, scratch_operands = 0 : i64, tpu.core_type = #tpu.core_type<tc>, window_params = [{transform_indices = @transform_0, window_bounds = array<i64: 16, 128>}, {transform_indices = @transform_1, window_bounds = array<i64: 16, 128>}]} {
    %c2048_i32 = arith.constant 2048 : i32
    %0 = arith.muli %arg0, %c2048_i32 : i32
    %1 = tpu.iota {dimensions = array<i32: 0>} : vector<16x128xi32>
    %c128_i32 = arith.constant 128 : i32
    %2 = vector.broadcast %c128_i32 : i32 to vector<16x128xi32>
    %3 = arith.muli %1, %2 : vector<16x128xi32>
    %4 = tpu.iota {dimensions = array<i32: 1>} : vector<16x128xi32>
    %5 = arith.addi %3, %4 : vector<16x128xi32>
    %6 = vector.broadcast %0 : i32 to vector<16x128xi32>
    %7 = arith.addi %5, %6 : vector<16x128xi32>
    %c0 = arith.constant 0 : index
    %8 = memref.load %arg1[%c0] : memref<1xi32, #tpu.memory_space<smem>>
    %c-1640531527_i32 = arith.constant -1640531527 : i32
    %9 = arith.xori %8, %c-1640531527_i32 : i32
    %c-2048144789_i32 = arith.constant -2048144789 : i32
    %10 = arith.muli %9, %c-2048144789_i32 : i32
    %11 = vector.broadcast %10 : i32 to vector<16x128xi32>
    %12 = arith.xori %7, %11 : vector<16x128xi32>
    %c16_i32 = arith.constant 16 : i32
    %13 = vector.broadcast %c16_i32 : i32 to vector<16x128xi32>
    %14 = arith.shrui %12, %13 : vector<16x128xi32>
    %15 = arith.xori %12, %14 : vector<16x128xi32>
    %c2146121005_i32 = arith.constant 2146121005 : i32
    %16 = vector.broadcast %c2146121005_i32 : i32 to vector<16x128xi32>
    %17 = arith.muli %15, %16 : vector<16x128xi32>
    %c15_i32 = arith.constant 15 : i32
    %18 = vector.broadcast %c15_i32 : i32 to vector<16x128xi32>
    %19 = arith.shrui %17, %18 : vector<16x128xi32>
    %20 = arith.xori %17, %19 : vector<16x128xi32>
    %c-2073254261_i32 = arith.constant -2073254261 : i32
    %21 = vector.broadcast %c-2073254261_i32 : i32 to vector<16x128xi32>
    %22 = arith.muli %20, %21 : vector<16x128xi32>
    %c16_i32_0 = arith.constant 16 : i32
    %23 = vector.broadcast %c16_i32_0 : i32 to vector<16x128xi32>
    %24 = arith.shrui %22, %23 : vector<16x128xi32>
    %25 = arith.xori %22, %24 : vector<16x128xi32>
    %c9_i32 = arith.constant 9 : i32
    %26 = vector.broadcast %c9_i32 : i32 to vector<16x128xi32>
    %27 = arith.shrui %25, %26 : vector<16x128xi32>
    %c1_i32 = arith.constant 1 : i32
    %28 = vector.broadcast %c1_i32 : i32 to vector<16x128xi32>
    %29 = arith.ori %27, %28 : vector<16x128xi32>
    %c1065353216_i32 = arith.constant 1065353216 : i32
    %30 = vector.broadcast %c1065353216_i32 : i32 to vector<16x128xi32>
    %31 = arith.ori %29, %30 : vector<16x128xi32>
    %32 = tpu.bitcast %31 : vector<16x128xi32> -> vector<16x128xf32>
    %cst = arith.constant 1.000000e+00 : f32
    %33 = vector.broadcast %cst : f32 to vector<16x128xf32>
    %34 = arith.subf %32, %33 : vector<16x128xf32>
    %cst_1 = arith.constant 1.000000e+00 : f32
    %35 = vector.broadcast %cst_1 : f32 to vector<16x128xf32>
    %36 = arith.subf %35, %34 : vector<16x128xf32>
    %37 = arith.minimumf %34, %36 : vector<16x128xf32>
    %38 = math.log %37 : vector<16x128xf32>
    %cst_2 = arith.constant -2.000000e+00 : f32
    %39 = vector.broadcast %cst_2 : f32 to vector<16x128xf32>
    %40 = arith.mulf %39, %38 : vector<16x128xf32>
    %41 = math.sqrt %40 : vector<16x128xf32>
    %cst_3 = arith.constant 1.032800e-02 : f32
    %42 = vector.broadcast %cst_3 : f32 to vector<16x128xf32>
    %43 = arith.mulf %42, %41 : vector<16x128xf32>
    %cst_4 = arith.constant 0.802852988 : f32
    %44 = vector.broadcast %cst_4 : f32 to vector<16x128xf32>
    %45 = arith.addf %43, %44 : vector<16x128xf32>
    %46 = arith.mulf %45, %41 : vector<16x128xf32>
    %cst_5 = arith.constant 2.515517 : f32
    %47 = vector.broadcast %cst_5 : f32 to vector<16x128xf32>
    %48 = arith.addf %46, %47 : vector<16x128xf32>
    %cst_6 = arith.constant 1.308000e-03 : f32
    %49 = vector.broadcast %cst_6 : f32 to vector<16x128xf32>
    %50 = arith.mulf %49, %41 : vector<16x128xf32>
    %cst_7 = arith.constant 1.892690e-01 : f32
    %51 = vector.broadcast %cst_7 : f32 to vector<16x128xf32>
    %52 = arith.addf %50, %51 : vector<16x128xf32>
    %53 = arith.mulf %52, %41 : vector<16x128xf32>
    %cst_8 = arith.constant 1.43278801 : f32
    %54 = vector.broadcast %cst_8 : f32 to vector<16x128xf32>
    %55 = arith.addf %53, %54 : vector<16x128xf32>
    %56 = arith.mulf %55, %41 : vector<16x128xf32>
    %cst_9 = arith.constant 1.000000e+00 : f32
    %57 = vector.broadcast %cst_9 : f32 to vector<16x128xf32>
    %58 = arith.addf %56, %57 : vector<16x128xf32>
    %59 = tpu.reciprocal %58 {approx = true} : vector<16x128xf32> -> vector<16x128xf32>
    %60 = arith.mulf %48, %59 : vector<16x128xf32>
    %61 = arith.subf %41, %60 : vector<16x128xf32>
    %cst_10 = arith.constant 5.000000e-01 : f32
    %62 = vector.broadcast %cst_10 : f32 to vector<16x128xf32>
    %63 = arith.cmpf olt, %34, %62 : vector<16x128xf32>
    %cst_11 = arith.constant 0.000000e+00 : f32
    %64 = vector.broadcast %cst_11 : f32 to vector<16x128xf32>
    %65 = arith.subf %64, %61 : vector<16x128xf32>
    %66 = arith.select %63, %65, %61 : vector<16x128xi1>, vector<16x128xf32>
    %c0_12 = arith.constant 0 : index
    %c0_13 = arith.constant 0 : index
    %67 = vector.load %arg2[%c0_12, %c0_13] : memref<16x128xf32, #tpu.memory_space<vmem>>, vector<16x128xf32>
    %cst_14 = arith.constant 1.000000e+00 : f32
    %68 = vector.broadcast %cst_14 : f32 to vector<16x128xf32>
    %69 = arith.mulf %68, %66 : vector<16x128xf32>
    %cst_15 = arith.constant 1.000000e+00 : f32
    %70 = vector.broadcast %cst_15 : f32 to vector<16x128xf32>
    %71 = arith.addf %70, %69 : vector<16x128xf32>
    %72 = arith.mulf %67, %71 : vector<16x128xf32>
    %c0_16 = arith.constant 0 : index
    %c0_17 = arith.constant 0 : index
    %73 = vector.load %arg3[%c0_16, %c0_17] : memref<16x128xf32, #tpu.memory_space<vmem>>, vector<16x128xf32>
    tpu.vector_store %arg3[%c0_16, %c0_17], %72 {strides = array<i32>} : memref<16x128xf32, #tpu.memory_space<vmem>>, vector<16x128xf32>,
    return
  }
  func.func @transform_0(%arg0: i32, %arg1: memref<1xi32, #tpu.memory_space<smem>>) -> (i32, i32) {
    %c0_i32 = arith.constant 0 : i32
    %c0_i32_0 = arith.constant 0 : i32
    return %arg0, %c0_i32 : i32, i32
  }
  func.func @transform_1(%arg0: i32, %arg1: memref<1xi32, #tpu.memory_space<smem>>) -> (i32, i32) {
    %c0_i32 = arith.constant 0 : i32
    %c0_i32_0 = arith.constant 0 : i32
    return %arg0, %c0_i32 : i32, i32
  }
}

</mosaic_0001>

<llo_original>
// kernel: tpu_custom_call.1
$region0: #{tpu_custom_call.1}
  #allocation0 [shape = 'u32[]', space=smem, size = 0x4, offset = 0x4, fixed_abs, tag = 'smem constant byte address 0x4 - core index']
  #allocation1 [shape = 'u32[144,128]{1,0:T(1,128)}', space=vmem, size = 0x12000, scoped, tag = 'internal scratch']
  #allocation2 [shape = 's32[1]{0}', space=sflag, size = 0x4, scoped, tag = 'scoped memory for tpu_custom_call.1']
  #allocation3 [shape = 's32[1]{0:T(128)S(6)}', space=smem, size = 0x200, scoped, tag = 'prefetched SMEM operand 0']
  %s0 = inlined_call_operand.<no memory space> [shape: s32[1], index: 0, kind: input, shape index: {}]
  %s1 = inlined_call_operand.hbm [shape: f32[16,128], index: 1, kind: input, shape index: {}]
  %s2 = inlined_call_operand.hbm [shape: f32[16,128], index: 2, kind: output, shape index: {}]
  %s3 = sld [smem:[#allocation0]]
  $region18: #{tpu_custom_call.1} parent=0
    _
  %s5 = ssub.s32 1, %s3
  %s6 = scalar_select 0, %s5, %s3
  %7 = sst [smem:[#allocation3]] %s0
  $region1: #{tpu_custom_call.1} parent=0
    #allocation4 [shape = 'u8[8192]{0}', space=vmem, size = 0x2000, scoped, tag = 'input window, operand 1, single buffered']
    #allocation5 [shape = 's32[1]{0}', space=sflag, size = 0x4, scoped, tag = 'scoped memory for tpu_custom_call.1']
    #allocation6 [shape = 's32[1]{0}', space=sflag, size = 0x4, scoped, tag = 'scoped memory for tpu_custom_call.1']
    #allocation7 [shape = 'u8[8192]{0}', space=vmem, size = 0x2000, scoped, tag = 'output window, operand 0, single buffered']
    %8 = vsyncpa [#allocation5], 0
    %9 = vsyncpa [#allocation6], 0
    // Predicated region
    $region2: #{tpu_custom_call.1} parent=1 // pred_check
      _
    $region3: #{tpu_custom_call.1} parent=1 // pred_check_branch
      %11 = sbr.rel (0) target = $region5
    $region4: #{tpu_custom_call.1} parent=1 // pred_region
      %s13 = ssub.s32 256, 256
      %14 = vsyncadd [#allocation5], %s13
      %s15 = sshll.u32 [#allocation4], 4
      %s16 = int_to_ptr.vmem [resolvable:$true] %s15
      %21 = dma.hbm_to_vmem [thread:$0]  %s1, 256, %s16, [#allocation5], 128, 128, 8
    $region5: #{tpu_custom_call.1} parent=1 // pred_fallthru
      _
    // Predicated region
    $region6: #{tpu_custom_call.1} parent=1 // pred_check
      _
    $region7: #{tpu_custom_call.1} parent=1 // pred_check_branch
      %23 = sbr.rel (0) target = $region9
    $region8: #{tpu_custom_call.1} parent=1 // pred_region
      %24 = dma.done [#allocation5], 256
    $region9: #{tpu_custom_call.1} parent=1 // pred_fallthru
      _
    %s25 = smul.u32 0, 2048
    %v26 = vlaneseq
    %v27 = vshrl.u32 %v26, 7
    %v28 = vadd.s32 %v27, 8
    %v29 = vmul.u32 %v27, 128
    %v30 = vmul.u32 %v28, 128
    %v31 = vlaneseq
    %v32 = vand.u32 %v31, 127
    %v33 = vadd.s32 %v29, %v32
    %v34 = vadd.s32 %v30, %v32
    %v35 = vstv %s25
    %v36 = vadd.s32 %v33, %v35
    %v37 = vadd.s32 %v34, %v35
    %s38 = sld [smem:[#allocation3]]
    %s39 = sxor.u32 %s38, 2654435769
    %s40 = smul.u32 %s39, 2246822507
    %v41 = vstv %s40
    %v42 = vxor.u32 %v36, %v41
    %v43 = vxor.u32 %v37, %v41
    %v44 = vshrl.u32 %v42, 16
    %v45 = vshrl.u32 %v43, 16
    %v46 = vxor.u32 %v42, %v44
    %v47 = vxor.u32 %v43, %v45
    %v48 = vmul.u32 %v46, 2146121005
    %v49 = vmul.u32 %v47, 2146121005
    %v50 = vshrl.u32 %v48, 15
    %v51 = vshrl.u32 %v49, 15
    %v52 = vxor.u32 %v48, %v50
    %v53 = vxor.u32 %v49, %v51
    %v54 = vmul.u32 %v52, 2221713035
    %v55 = vmul.u32 %v53, 2221713035
    %v56 = vshrl.u32 %v54, 16
    %v57 = vshrl.u32 %v55, 16
    %v58 = vxor.u32 %v54, %v56
    %v59 = vxor.u32 %v55, %v57
    %v60 = vshrl.u32 %v58, 9
    %v61 = vshrl.u32 %v59, 9
    %v62 = vor.u32 %v60, 1
    %v63 = vor.u32 %v61, 1
    %v64 = vor.u32 %v62, 1065353216
    %v65 = vor.u32 %v63, 1065353216
    %v68 = vsub.f32 %v64, 1.0
    %v69 = vsub.f32 %v65, 1.0
    %v70 = vsub.f32 1.0, %v68
    %v71 = vsub.f32 1.0, %v69
    %v72 = vmin.f32 %v68, %v70
    %v73 = vmin.f32 %v69, %v71
    %v74 = vlog2.pop %v72
    %v75 = vmul.f32 %v74, 0.6931472
    %v76 = vlog2.pop %v73
    %v77 = vmul.f32 %v76, 0.6931472
    %v78 = vmul.f32 %v75, -2.0
    %v79 = vmul.f32 %v77, -2.0
    %v80 = vrsqrt.pop %v78
    %v81 = vmul.f32 %v78, %v80
    %vm82 = vcmp.eq.f32.partialorder %v78, inf
    %v83 = vsel %vm82, %v78, %v81
    %vm84 = vcmp.eq.f32.partialorder %v78, 0.0
    %v85 = vand.u32 %v78, 2147483648
    %v86 = vsel %vm84, %v85, %v83
    %v87 = vrsqrt.pop %v79
    %v88 = vmul.f32 %v79, %v87
    %vm89 = vcmp.eq.f32.partialorder %v79, inf
    %v90 = vsel %vm89, %v79, %v88
    %vm91 = vcmp.eq.f32.partialorder %v79, 0.0
    %v92 = vand.u32 %v79, 2147483648
    %v93 = vsel %vm91, %v92, %v90
    %v94 = vmul.f32 %v86, 0.010328
    %v95 = vmul.f32 %v93, 0.010328
    %v96 = vadd.f32 %v94, 0.802853
    %v97 = vadd.f32 %v95, 0.802853
    %v98 = vmul.f32 %v96, %v86
    %v99 = vmul.f32 %v97, %v93
    %v100 = vadd.f32 %v98, 2.515517
    %v101 = vadd.f32 %v99, 2.515517
    %v102 = vmul.f32 %v86, 0.001308
    %v103 = vmul.f32 %v93, 0.001308
    %v104 = vadd.f32 %v102, 0.189269
    %v105 = vadd.f32 %v103, 0.189269
    %v106 = vmul.f32 %v104, %v86
    %v107 = vmul.f32 %v105, %v93
    %v108 = vadd.f32 %v106, 1.432788
    %v109 = vadd.f32 %v107, 1.432788
    %v110 = vmul.f32 %v108, %v86
    %v111 = vmul.f32 %v109, %v93
    %v112 = vadd.f32 %v110, 1.0
    %v113 = vadd.f32 %v111, 1.0
    %v114 = vrcp.pop %v112
    %v115 = vrcp.pop %v113
    %v116 = vmul.f32 %v100, %v114
    %v117 = vmul.f32 %v101, %v115
    %v118 = vsub.f32 %v86, %v116
    %v119 = vsub.f32 %v93, %v117
    %vm120 = vcmp.lt.f32.partialorder %v68, 0.5
    %vm121 = vcmp.lt.f32.partialorder %v69, 0.5
    %v122 = vsub.f32 0.0, %v118
    %v123 = vsub.f32 0.0, %v119
    %v124 = vsel %vm120, %v122, %v118
    %v125 = vsel %vm121, %v123, %v119
    %v126 = vld [vmem:[#allocation4] sm:$0xff]
    %v127 = vld [vmem:[#allocation4 + $0x8] sm:$0xff]
    %v128 = vadd.f32 %v124, 1.0
    %v129 = vadd.f32 %v125, 1.0
    %v130 = vmul.f32 %v126, %v128
    %v131 = vmul.f32 %v127, %v129
    %132 = vst [vmem:[#allocation7] sm:$0xff] %v130
    %133 = vst [vmem:[#allocation7 + $0x8] sm:$0xff] %v131
    // Predicated region
    $region10: #{tpu_custom_call.1} parent=1 // pred_check
      _
    $region11: #{tpu_custom_call.1} parent=1 // pred_check_branch
      %135 = sbr.rel (0) target = $region13
    $region12: #{tpu_custom_call.1} parent=1 // pred_region
      %s137 = ssub.s32 256, 256
      %138 = vsyncadd [#allocation6], %s137
      %s139 = sshll.u32 [#allocation7], 4
      %s140 = int_to_ptr.vmem [resolvable:$true] %s139
      %145 = dma.vmem_to_hbm [thread:$0]  %s140, 256, %s2, [#allocation6], 128, 128, 8
    $region13: #{tpu_custom_call.1} parent=1 // pred_fallthru
      _
    // Predicated region
    $region14: #{tpu_custom_call.1} parent=1 // pred_check
      _
    $region15: #{tpu_custom_call.1} parent=1 // pred_check_branch
      %147 = sbr.rel (0) target = $region17
    $region16: #{tpu_custom_call.1} parent=1 // pred_region
      %148 = dma.done [#allocation6], 256
    $region17: #{tpu_custom_call.1} parent=1 // pred_fallthru
      _
    %149 = vsyncpa [#allocation5], 1
    %150 = vsyncpa [#allocation6], 1

</llo_original>
